<compile_context>
chip_gen: v6e
topology: v6e:2x2x1
jax: 0.10.0
libtpu: 0.0.40
codegen_flags: <defaults>
</compile_context>

<pallas_src>
import math

import jax
import jax.numpy as jnp
from jax.experimental import pallas as pl
from jax.experimental.pallas import tpu as pltpu


def _round_up(x, m):
    return ((x + m - 1) // m) * m


def _classifier_kernel(x_ref, w1_ref, b1_ref, w2_ref, b2_ref, o_ref, acc_ref):
    """One (row-tile, hidden-tile) step of Linear -> Tanh -> Linear -> Sigmoid -> clamp."""
    j = pl.program_id(1)

    @pl.when(j == 0)
    def _():
        acc_ref[...] = jnp.zeros_like(acc_ref)

    # First linear + tanh on a (tm, tf) chunk of the hidden dim; accumulate the
    # second linear over hidden chunks so only (tm, tf) of `h` is live.
    h = jnp.tanh(
        jnp.dot(x_ref[...], w1_ref[...], preferred_element_type=jnp.float32)
        + b1_ref[...])
    acc_ref[...] += jnp.dot(h.astype(w2_ref.dtype), w2_ref[...],
                            preferred_element_type=jnp.float32)

    @pl.when(j == pl.num_programs(1) - 1)
    def _():
        z = acc_ref[...] + b2_ref[...]
        # sigmoid(z) == 0.5 * (tanh(z / 2) + 1)  (exact identity, EUP tanh)
        p = 0.5 * (jnp.tanh(0.5 * z) + 1.0)
        o_ref[...] = jnp.clip(p, 1e-4, 1.0 - 1e-4).astype(o_ref.dtype)


def turn_switch_col_probs(x, w1, b1, w2, b2, *, tm=256, tf=512, compute_dtype=None):
    """clamp(sigmoid(tanh(x @ w1 + b1) @ w2 + b2), 1e-4, 1-1e-4) in float32.

    x:  (..., input_dim)
    w1: (input_dim, hidden_dim)    (transpose of torch nn.Linear.weight)
    b1: (hidden_dim,)
    w2: (hidden_dim, label_size)
    b2: (label_size,)
    """
    orig_shape = x.shape
    d_in = orig_shape[-1]
    hidden = w1.shape[1]
    d_out = w2.shape[1]
    m = 1
    for s in orig_shape[:-1]:
        m *= int(s)

    if compute_dtype is None:
        compute_dtype = x.dtype
    compute_dtype = jnp.dtype(compute_dtype)
    cb = compute_dtype.itemsize

    # Pad feature dims to lane (128) multiples; rows to a sublane-friendly tile.
    d_in_p = _round_up(d_in, 128)
    d_out_p = _round_up(d_out, 128)
    tm_eff = min(tm, _round_up(m, 16))       # 16 keeps bf16 sublane packing happy
    m_p = _round_up(m, tm_eff)
    tf_eff = min(tf, _round_up(hidden, 128))
    hid_p = _round_up(hidden, tf_eff)

    x2 = x.reshape(m, d_in).astype(compute_dtype)
    x2 = jnp.pad(x2, ((0, m_p - m), (0, d_in_p - d_in)))
    w1p = jnp.pad(w1.astype(compute_dtype),
                  ((0, d_in_p - d_in), (0, hid_p - hidden)))
    w2p = jnp.pad(w2.astype(compute_dtype),
                  ((0, hid_p - hidden), (0, d_out_p - d_out)))
    # Biases stay f32 (f32 bias adds regardless of compute dtype).
    b1p = jnp.pad(b1.astype(jnp.float32), (0, hid_p - hidden)).reshape(1, hid_p)
    b2p = jnp.pad(b2.astype(jnp.float32), (0, d_out_p - d_out)).reshape(1, d_out_p)

    grid = (m_p // tm_eff, hid_p // tf_eff)

    # Explicit scoped-VMEM budget: double-buffered x / W1-chunk / W2-chunk / out
    # tiles + f32 accumulator + live (tm, tf) intermediate, with headroom.
    est = (2 * (tm_eff * d_in_p + d_in_p * tf_eff + tf_eff * d_out_p) * cb
           + 2 * (tf_eff + d_out_p) * 4
           + 2 * tm_eff * d_out_p * 4
           + tm_eff * d_out_p * 4
           + tm_eff * tf_eff * 4)
    vmem_limit = int(min(max(est * 5 // 4 + (4 << 20), 16 << 20), 64 << 20))

    cost = pl.CostEstimate(
        flops=int(2 * m_p * d_in_p * hid_p + 2 * m_p * hid_p * d_out_p),
        transcendentals=int(m_p * hid_p + m_p * d_out_p),
        bytes_accessed=int(x2.size * cb
                           + grid[0] * (w1p.size + w2p.size) * cb
                           + b1p.size * 4 + b2p.size * 4
                           + m_p * d_out_p * 4),
    )

    out = pl.pallas_call(
        _classifier_kernel,
        out_shape=jax.ShapeDtypeStruct((m_p, d_out_p), jnp.float32),
        grid_spec=pltpu.PrefetchScalarGridSpec(
            num_scalar_prefetch=0,
            grid=grid,
            in_specs=[
                pl.BlockSpec((tm_eff, d_in_p), lambda i, j: (i, 0)),   # x tile
                pl.BlockSpec((d_in_p, tf_eff), lambda i, j: (0, j)),   # W1 chunk
                pl.BlockSpec((1, tf_eff), lambda i, j: (0, j)),        # b1 chunk
                pl.BlockSpec((tf_eff, d_out_p), lambda i, j: (j, 0)),  # W2 chunk
                pl.BlockSpec((1, d_out_p), lambda i, j: (0, 0)),       # b2
            ],
            out_specs=pl.BlockSpec((tm_eff, d_out_p), lambda i, j: (i, 0)),
            scratch_shapes=[pltpu.VMEM((tm_eff, d_out_p), jnp.float32)],
        ),
        compiler_params=pltpu.CompilerParams(
            dimension_semantics=("parallel", "arbitrary"),
            vmem_limit_bytes=vmem_limit,
        ),
        cost_estimate=cost,
    )(x2, w1p, b1p, w2p, b2p)

    out = out[:m, :d_out].reshape(*orig_shape[:-1], d_out)
    return out


def turn_switch_col_classifier_forward(x, params, label=None, *, loss_scalar=8.0,
                                        tm=256, tf=512, compute_dtype=None):
    """Mirrors TurnSwitchColClassifier.forward (eval mode)."""
    # TODO(synk): input dropout is the identity here (inference / p=0 path);
    # training-mode dropout would use pltpu.prng_seed + pltpu.prng_random_bits.
    probs = turn_switch_col_probs(x, params["w1"], params["b1"],
                                  params["w2"], params["b2"],
                                  tm=tm, tf=tf, compute_dtype=compute_dtype)
    logits = jnp.squeeze(probs)
    logits_m = jnp.clip(logits, 1e-4, 1.0 - 1e-4)  # clamp already applied in-kernel
    out = {}
    if label is not None:
        y = label.astype(jnp.float32)
        # nn.BCELoss (mean) on clamped probs; tiny scalar reduction kept in JAX.
        bce = -(y * jnp.log(logits_m) + (1.0 - y) * jnp.log1p(-logits_m))
        out["loss"] = jnp.mean(bce) * loss_scalar
    else:
        out["loss"] = 0.0
    out["probs"] = logits_m
    return out


if __name__ == "__main__":
    # Small shapes implied by the module: col/table embeddings -> multi-label probs.
    col_tab_len, input_dim, hidden_dim, label_size = 24, 32, 64, 16
    loss_scalar = 8.0

    key = jax.random.PRNGKey(0)
    kx, kw1, kb1, kw2, kb2, kl = jax.random.split(key, 6)

    x = jax.random.normal(kx, (col_tab_len, input_dim), dtype=jnp.float32)
    bound1 = 1.0 / math.sqrt(input_dim)
    w1 = jax.random.uniform(kw1, (input_dim, hidden_dim), jnp.float32, -bound1, bound1)
    b1 = jax.random.uniform(kb1, (hidden_dim,), jnp.float32, -bound1, bound1)
    bound2 = 1.0 / math.sqrt(hidden_dim)
    w2 = jax.random.uniform(kw2, (hidden_dim, label_size), jnp.float32, -bound2, bound2)
    b2 = jax.random.uniform(kb2, (label_size,), jnp.float32, -bound2, bound2)
    label = (jax.random.uniform(kl, (col_tab_len, label_size)) < 0.2).astype(jnp.float32)

    params = {"w1": w1, "b1": b1, "w2": w2, "b2": b2}

    # Pure-JAX reference (eval-mode dropout == identity).
    h_ref = jnp.tanh(x @ w1 + b1)
    probs_ref = jnp.clip(jax.nn.sigmoid(h_ref @ w2 + b2), 1e-4, 1.0 - 1e-4)
    loss_ref = jnp.mean(-(label * jnp.log(probs_ref)
                          + (1.0 - label) * jnp.log1p(-probs_ref))) * loss_scalar

    # f32 compute path: tight tolerance.
    out_f32 = turn_switch_col_classifier_forward(x, params, label,
                                                 loss_scalar=loss_scalar)
    probs_f32 = jax.block_until_ready(out_f32["probs"])
    assert probs_f32.shape == (col_tab_len, label_size)
    assert jnp.allclose(probs_f32, probs_ref, atol=1e-4, rtol=1e-4)
    assert jnp.allclose(out_f32["loss"], loss_ref, atol=1e-4, rtol=1e-4)

    # bf16 compute path (v6e/v7x-friendly): f32 accumulation, looser tolerance.
    out_bf16 = turn_switch_col_classifier_forward(x, params, label,
                                                  loss_scalar=loss_scalar,
                                                  compute_dtype=jnp.bfloat16)
    probs_bf16 = jax.block_until_ready(out_bf16["probs"])
    assert jnp.allclose(probs_bf16, probs_ref, atol=3e-2, rtol=3e-2)

    print("KERNEL_OK")
</pallas_src>

<mosaic_0001>
module attributes {stable_mosaic.version = 11 : i64} {
  func.func @_classifier_kernel(%arg0: i32, %arg1: i32, %arg2: memref<32x128xf32, #tpu.memory_space<vmem>>, %arg3: memref<128x128xf32, #tpu.memory_space<vmem>>, %arg4: memref<1x128xf32, #tpu.memory_space<vmem>>, %arg5: memref<128x128xf32, #tpu.memory_space<vmem>>, %arg6: memref<1x128xf32, #tpu.memory_space<vmem>>, %arg7: memref<32x128xf32, #tpu.memory_space<vmem>>, %arg8: memref<32x128xf32, #tpu.memory_space<vmem>>) attributes {dimension_semantics = [#tpu.dimension_semantics<parallel>, #tpu.dimension_semantics<arbitrary>], iteration_bounds = array<i64: 1, 1>, scalar_prefetch = 0 : i64, scratch_operands = 1 : i64, tpu.core_type = #tpu.core_type<tc>, window_params = [{transform_indices = @transform_0, window_bounds = array<i64: 32, 128>}, {transform_indices = @transform_1, window_bounds = array<i64: 128, 128>}, {transform_indices = @transform_2, window_bounds = array<i64: 1, 128>}, {transform_indices = @transform_3, window_bounds = array<i64: 128, 128>}, {pipeline_mode = #tpu.pipeline_mode<synchronous>, transform_indices = @transform_4, window_bounds = array<i64: 1, 128>}, {transform_indices = @transform_5, window_bounds = array<i64: 32, 128>}]} {
    %c0_i32 = arith.constant 0 : i32
    %0 = arith.cmpi eq, %arg1, %c0_i32 : i32
    %1 = arith.extui %0 : i1 to i32
    %c0_i32_0 = arith.constant 0 : i32
    %2 = arith.cmpi ne, %1, %c0_i32_0 : i32
    scf.if %2 {
      %cst_15 = arith.constant 0.000000e+00 : f32
      %18 = vector.broadcast %cst_15 : f32 to vector<32x128xf32>
      %c0_16 = arith.constant 0 : index
      %c0_17 = arith.constant 0 : index
      %19 = vector.load %arg8[%c0_16, %c0_17] : memref<32x128xf32, #tpu.memory_space<vmem>>, vector<32x128xf32>
      tpu.vector_store %arg8[%c0_16, %c0_17], %18 {strides = array<i32>} : memref<32x128xf32, #tpu.memory_space<vmem>>, vector<32x128xf32>,
    } else {
    }
    %c0 = arith.constant 0 : index
    %c0_1 = arith.constant 0 : index
    %3 = vector.load %arg2[%c0, %c0_1] : memref<32x128xf32, #tpu.memory_space<vmem>>, vector<32x128xf32>
    %c0_2 = arith.constant 0 : index
    %c0_3 = arith.constant 0 : index
    %4 = vector.load %arg3[%c0_2, %c0_3] : memref<128x128xf32, #tpu.memory_space<vmem>>, vector<128x128xf32>
    %cst = arith.constant dense<0.000000e+00> : vector<32x128xf32>
    %5 = tpu.matmul %3, %4, %cst {dimension_numbers = #tpu.dot_dimension_numbers<[1], [0], [0], [1], [0, 0, 1, 1], [], []>} : vector<32x128xf32>, vector<128x128xf32>, vector<32x128xf32> -> vector<32x128xf32>
    %c0_4 = arith.constant 0 : index
    %c0_5 = arith.constant 0 : index
    %6 = vector.load %arg4[%c0_4, %c0_5] : memref<1x128xf32, #tpu.memory_space<vmem>>, vector<1x128xf32>
    %7 = vector.broadcast %6 : vector<1x128xf32> to vector<32x128xf32>
    %8 = arith.addf %5, %7 : vector<32x128xf32>
    %9 = math.tanh %8 : vector<32x128xf32>
    %c0_6 = arith.constant 0 : index
    %c0_7 = arith.constant 0 : index
    %10 = vector.load %arg8[%c0_6, %c0_7] : memref<32x128xf32, #tpu.memory_space<vmem>>, vector<32x128xf32>
    %c0_8 = arith.constant 0 : index
    %c0_9 = arith.constant 0 : index
    %11 = vector.load %arg5[%c0_8, %c0_9] : memref<128x128xf32, #tpu.memory_space<vmem>>, vector<128x128xf32>
    %cst_10 = arith.constant dense<0.000000e+00> : vector<32x128xf32>
    %12 = tpu.matmul %9, %11, %cst_10 {dimension_numbers = #tpu.dot_dimension_numbers<[1], [0], [0], [1], [0, 0, 1, 1], [], []>} : vector<32x128xf32>, vector<128x128xf32>, vector<32x128xf32> -> vector<32x128xf32>
    %13 = arith.addf %10, %12 : vector<32x128xf32>
    %c0_11 = arith.constant 0 : index
    %c0_12 = arith.constant 0 : index
    %14 = vector.load %arg8[%c0_11, %c0_12] : memref<32x128xf32, #tpu.memory_space<vmem>>, vector<32x128xf32>
    tpu.vector_store %arg8[%c0_11, %c0_12], %13 {strides = array<i32>} : memref<32x128xf32, #tpu.memory_space<vmem>>, vector<32x128xf32>,
    %c0_i32_13 = arith.constant 0 : i32
    %15 = arith.cmpi eq, %arg1, %c0_i32_13 : i32
    %16 = arith.extui %15 : i1 to i32
    %c0_i32_14 = arith.constant 0 : i32
    %17 = arith.cmpi ne, %16, %c0_i32_14 : i32
    scf.if %17 {
      %c0_15 = arith.constant 0 : index
      %c0_16 = arith.constant 0 : index
      %18 = vector.load %arg8[%c0_15, %c0_16] : memref<32x128xf32, #tpu.memory_space<vmem>>, vector<32x128xf32>
      %c0_17 = arith.constant 0 : index
      %c0_18 = arith.constant 0 : index
      %19 = vector.load %arg6[%c0_17, %c0_18] : memref<1x128xf32, #tpu.memory_space<vmem>>, vector<1x128xf32>
      %20 = vector.broadcast %19 : vector<1x128xf32> to vector<32x128xf32>
      %21 = arith.addf %18, %20 : vector<32x128xf32>
      %cst_19 = arith.constant 5.000000e-01 : f32
      %22 = vector.broadcast %cst_19 : f32 to vector<32x128xf32>
      %23 = arith.mulf %22, %21 : vector<32x128xf32>
      %24 = math.tanh %23 : vector<32x128xf32>
      %cst_20 = arith.constant 1.000000e+00 : f32
      %25 = vector.broadcast %cst_20 : f32 to vector<32x128xf32>
      %26 = arith.addf %24, %25 : vector<32x128xf32>
      %cst_21 = arith.constant 5.000000e-01 : f32
      %27 = vector.broadcast %cst_21 : f32 to vector<32x128xf32>
      %28 = arith.mulf %27, %26 : vector<32x128xf32>
      %cst_22 = arith.constant 9.99999974E-5 : f32
      %cst_23 = arith.constant 0.999899983 : f32
      %29 = vector.broadcast %cst_22 : f32 to vector<32x128xf32>
      %30 = arith.maximumf %29, %28 : vector<32x128xf32>
      %31 = vector.broadcast %cst_23 : f32 to vector<32x128xf32>
      %32 = arith.minimumf %31, %30 : vector<32x128xf32>
      %c0_24 = arith.constant 0 : index
      %c0_25 = arith.constant 0 : index
      %33 = vector.load %arg7[%c0_24, %c0_25] : memref<32x128xf32, #tpu.memory_space<vmem>>, vector<32x128xf32>
      tpu.vector_store %arg7[%c0_24, %c0_25], %32 {strides = array<i32>} : memref<32x128xf32, #tpu.memory_space<vmem>>, vector<32x128xf32>,
    } else {
    }
    return
  }
  func.func @transform_0(%arg0: i32, %arg1: i32) -> (i32, i32) {
    %c0_i32 = arith.constant 0 : i32
    %c0_i32_0 = arith.constant 0 : i32
    return %arg0, %c0_i32 : i32, i32
  }
  func.func @transform_1(%arg0: i32, %arg1: i32) -> (i32, i32) {
    %c0_i32 = arith.constant 0 : i32
    %c0_i32_0 = arith.constant 0 : i32
    return %c0_i32, %arg1 : i32, i32
  }
  func.func @transform_2(%arg0: i32, %arg1: i32) -> (i32, i32) {
    %c0_i32 = arith.constant 0 : i32
    %c0_i32_0 = arith.constant 0 : i32
    return %c0_i32, %arg1 : i32, i32
  }
  func.func @transform_3(%arg0: i32, %arg1: i32) -> (i32, i32) {
    %c0_i32 = arith.constant 0 : i32
    %c0_i32_0 = arith.constant 0 : i32
    return %arg1, %c0_i32 : i32, i32
  }
  func.func @transform_4(%arg0: i32, %arg1: i32) -> (i32, i32) {
    %c0_i32 = arith.constant 0 : i32
    %c0_i32_0 = arith.constant 0 : i32
    %c0_i32_1 = arith.constant 0 : i32
    return %c0_i32, %c0_i32_0 : i32, i32
  }
  func.func @transform_5(%arg0: i32, %arg1: i32) -> (i32, i32) {
    %c0_i32 = arith.constant 0 : i32
    %c0_i32_0 = arith.constant 0 : i32
    return %arg0, %c0_i32 : i32, i32
  }
}

</mosaic_0001>

<llo_original>
// kernel: tpu_custom_call.1
$region0: #{tpu_custom_call.1}
  #allocation0 [shape = 'u32[]', space=smem, size = 0x4, offset = 0x4, fixed_abs, tag = 'smem constant byte address 0x4 - core index']
  #allocation1 [shape = 'u32[144,128]{1,0:T(1,128)}', space=vmem, size = 0x12000, scoped, tag = 'internal scratch']
  #allocation2 [shape = 'f32[32,128]{1,0:T(8,128)}', space=vmem, size = 0x4000, scoped, tag = 'scratch operand']
  %s0 = inlined_call_operand.hbm [shape: f32[32,128], index: 0, kind: input, shape index: {}]
  %s1 = inlined_call_operand.hbm [shape: f32[128,128], index: 1, kind: input, shape index: {}]
  %s2 = inlined_call_operand.vmem [shape: f32[1,128], index: 2, kind: input, shape index: {}]
  %s3 = inlined_call_operand.hbm [shape: f32[128,128], index: 3, kind: input, shape index: {}]
  %s4 = inlined_call_operand.vmem [shape: f32[1,128], index: 4, kind: input, shape index: {}]
  %s5 = inlined_call_operand.hbm [shape: f32[32,128], index: 5, kind: output, shape index: {}]
  %s6 = sld [smem:[#allocation0]]
  $region50: #{tpu_custom_call.1} parent=0
    _
  %s8 = ssub.s32 1, %s6
  %s9 = scalar_select 0, %s8, %s6
  $region1: #{tpu_custom_call.1} parent=0
    #allocation3 [shape = 'u8[16384]{0}', space=vmem, size = 0x4000, scoped, tag = 'input window, operand 0, single buffered']
    #allocation4 [shape = 's32[1]{0}', space=sflag, size = 0x4, scoped, tag = 'scoped memory for tpu_custom_call.1']
    #allocation5 [shape = 's32[1]{0}', space=sflag, size = 0x4, scoped, tag = 'scoped memory for tpu_custom_call.1']
    #allocation6 [shape = 'u8[65536]{0}', space=vmem, size = 0x10000, scoped, tag = 'input window, operand 1, single buffered']
    #allocation7 [shape = 's32[1]{0}', space=sflag, size = 0x4, scoped, tag = 'scoped memory for tpu_custom_call.1']
    #allocation8 [shape = 'u8[65536]{0}', space=vmem, size = 0x10000, scoped, tag = 'input window, operand 3, single buffered']
    #allocation9 [shape = 'u8[16384]{0}', space=vmem, size = 0x4000, scoped, tag = 'output window, operand 0, single buffered']
    %10 = vsyncpa [#allocation4], 0
    %11 = vsyncpa [#allocation7], 0
    %12 = vsyncpa [#allocation5], 0
    // Predicated region
    $region2: #{tpu_custom_call.1} parent=1 // pred_check
      _
    $region3: #{tpu_custom_call.1} parent=1 // pred_check_branch
      %14 = sbr.rel (0) target = $region5
    $region4: #{tpu_custom_call.1} parent=1 // pred_region
      %s16 = ssub.s32 512, 512
      %17 = vsyncadd [#allocation4], %s16
      %s18 = sshll.u32 [#allocation3], 4
      %s19 = int_to_ptr.vmem [resolvable:$true] %s18
      %24 = dma.hbm_to_vmem [thread:$0]  %s0, 512, %s19, [#allocation4], 128, 128, 8
    $region5: #{tpu_custom_call.1} parent=1 // pred_fallthru
      _
    // Predicated region
    $region6: #{tpu_custom_call.1} parent=1 // pred_check
      _
    $region7: #{tpu_custom_call.1} parent=1 // pred_check_branch
      %26 = sbr.rel (0) target = $region9
    $region8: #{tpu_custom_call.1} parent=1 // pred_region
      %s28 = ssub.s32 2048, 2048
      %29 = vsyncadd [#allocation7], %s28
      %s30 = sshll.u32 [#allocation6], 4
      %s31 = int_to_ptr.vmem [resolvable:$true] %s30
      %36 = dma.hbm_to_vmem [thread:$0]  %s1, 2048, %s31, [#allocation7], 128, 128, 8
    $region9: #{tpu_custom_call.1} parent=1 // pred_fallthru
      _
    // Predicated region
    $region10: #{tpu_custom_call.1} parent=1 // pred_check
      _
    $region11: #{tpu_custom_call.1} parent=1 // pred_check_branch
      %38 = sbr.rel (0) target = $region13
    $region12: #{tpu_custom_call.1} parent=1 // pred_region
      _
    $region13: #{tpu_custom_call.1} parent=1 // pred_fallthru
      _
    // Predicated region
    $region14: #{tpu_custom_call.1} parent=1 // pred_check
      _
    $region15: #{tpu_custom_call.1} parent=1 // pred_check_branch
      %40 = sbr.rel (0) target = $region17
    $region16: #{tpu_custom_call.1} parent=1 // pred_region
      %s42 = ssub.s32 2048, 2048
      %43 = vsyncadd [#allocation7], %s42
      %s44 = sshll.u32 [#allocation8], 4
      %s45 = int_to_ptr.vmem [resolvable:$true] %s44
      %50 = dma.hbm_to_vmem [thread:$0]  %s3, 2048, %s45, [#allocation7], 128, 128, 8
    $region17: #{tpu_custom_call.1} parent=1 // pred_fallthru
      _
    // Predicated region
    $region18: #{tpu_custom_call.1} parent=1 // pred_check
      _
    $region19: #{tpu_custom_call.1} parent=1 // pred_check_branch
      %52 = sbr.rel (0) target = $region21
    $region20: #{tpu_custom_call.1} parent=1 // pred_region
      _
    $region21: #{tpu_custom_call.1} parent=1 // pred_fallthru
      _
    // Predicated region
    $region22: #{tpu_custom_call.1} parent=1 // pred_check
      _
    $region23: #{tpu_custom_call.1} parent=1 // pred_check_branch
      %54 = sbr.rel (0) target = $region25
    $region24: #{tpu_custom_call.1} parent=1 // pred_region
      %55 = dma.done [#allocation4], 512
    $region25: #{tpu_custom_call.1} parent=1 // pred_fallthru
      _
    // Predicated region
    $region26: #{tpu_custom_call.1} parent=1 // pred_check
      _
    $region27: #{tpu_custom_call.1} parent=1 // pred_check_branch
      %57 = sbr.rel (0) target = $region29
    $region28: #{tpu_custom_call.1} parent=1 // pred_region
      %58 = dma.done [#allocation7], 2048
    $region29: #{tpu_custom_call.1} parent=1 // pred_fallthru
      _
    // Predicated region
    $region30: #{tpu_custom_call.1} parent=1 // pred_check
      _
    $region31: #{tpu_custom_call.1} parent=1 // pred_check_branch
      %60 = sbr.rel (0) target = $region33
    $region32: #{tpu_custom_call.1} parent=1 // pred_region
      %61 = dma.done [#allocation7], 2048
    $region33: #{tpu_custom_call.1} parent=1 // pred_fallthru
      _
    %p62 = scmp.eq.s32.totalorder 0, 0
    // Predicated region
    $region34: #{tpu_custom_call.1} parent=1 // pred_check
      %p63 = pneg %p62
    $region35: #{tpu_custom_call.1} parent=1 // pred_check_branch
      %65 = sbr.rel (%p63) target = $region37
    $region36: #{tpu_custom_call.1} parent=1 // pred_region
      %66 = vst [vmem:[#allocation2] sm:$0xff] 0.0
      %67 = vst [vmem:[#allocation2 + $0x8] sm:$0xff] 0.0
      %68 = vst [vmem:[#allocation2 + $0x10] sm:$0xff] 0.0
      %69 = vst [vmem:[#allocation2 + $0x18] sm:$0xff] 0.0
    $region37: #{tpu_custom_call.1} parent=1 // pred_fallthru
      _
    %v70 = vld [vmem:[#allocation3] sm:$0xff]
    %v71 = vld [vmem:[#allocation3 + $0x8] sm:$0xff]
    %v72 = vld [vmem:[#allocation3 + $0x10] sm:$0xff]
    %v73 = vld [vmem:[#allocation3 + $0x18] sm:$0xff]
    %v74 = vld [vmem:[#allocation6] sm:$0xff]
    %v75 = vld [vmem:[#allocation6 + $0x8] sm:$0xff]
    %v76 = vld [vmem:[#allocation6 + $0x10] sm:$0xff]
    %v77 = vld [vmem:[#allocation6 + $0x18] sm:$0xff]
    %v78 = vld [vmem:[#allocation6 + $0x20] sm:$0xff]
    %v79 = vld [vmem:[#allocation6 + $0x28] sm:$0xff]
    %v80 = vld [vmem:[#allocation6 + $0x30] sm:$0xff]
    %v81 = vld [vmem:[#allocation6 + $0x38] sm:$0xff]
    %v82 = vld [vmem:[#allocation6 + $0x40] sm:$0xff]
    %v83 = vld [vmem:[#allocation6 + $0x48] sm:$0xff]
    %v84 = vld [vmem:[#allocation6 + $0x50] sm:$0xff]
    %v85 = vld [vmem:[#allocation6 + $0x58] sm:$0xff]
    %v86 = vld [vmem:[#allocation6 + $0x60] sm:$0xff]
    %v87 = vld [vmem:[#allocation6 + $0x68] sm:$0xff]
    %v88 = vld [vmem:[#allocation6 + $0x70] sm:$0xff]
    %v89 = vld [vmem:[#allocation6 + $0x78] sm:$0xff]
    %v90 = vld [vmem:[%s2] sm:$0x1]
    %v92 = vlaneseq
    %v93 = vshrl.u32 %v92, 7
    %v94 = vsub.s32 0, %v93
    %v95 = vrot.slane %v90, %v94
    %97 = vmatprep.subr.mxu0 0.0
    %98 = vmatpush1.msra.mxu0 %v89
    %99 = vmatprep.subr.mxu0 0.0
    %100 = vmatpush1.msra.mxu0 %v88
    %101 = vmatprep.subr.mxu0 0.0
    %102 = vmatpush1.msra.mxu0 %v87
    %103 = vmatprep.subr.mxu0 0.0
    %104 = vmatpush1.msra.mxu0 %v86
    %105 = vmatprep.subr.mxu0 0.0
    %106 = vmatpush1.msra.mxu0 %v85
    %107 = vmatprep.subr.mxu0 0.0
    %108 = vmatpush1.msra.mxu0 %v84
    %109 = vmatprep.subr.mxu0 0.0
    %110 = vmatpush1.msra.mxu0 %v83
    %111 = vmatprep.subr.mxu0 0.0
    %112 = vmatpush1.msra.mxu0 %v82
    %113 = vmatprep.subr.mxu0 0.0
    %114 = vmatpush1.msra.mxu0 %v81
    %115 = vmatprep.subr.mxu0 0.0
    %116 = vmatpush1.msra.mxu0 %v80
    %117 = vmatprep.subr.mxu0 0.0
    %118 = vmatpush1.msra.mxu0 %v79
    %119 = vmatprep.subr.mxu0 0.0
    %120 = vmatpush1.msra.mxu0 %v78
    %121 = vmatprep.subr.mxu0 0.0
    %122 = vmatpush1.msra.mxu0 %v77
    %123 = vmatprep.subr.mxu0 0.0
    %124 = vmatpush1.msra.mxu0 %v76
    %125 = vmatprep.subr.mxu0 0.0
    %126 = vmatpush1.msra.mxu0 %v75
    %127 = vmatprep.subr.mxu0 0.0
    %128 = vmatpush1.msra.mxu0 %v74
    %129 = vmatprep.subr.mxu0 0.0
    %130 = vmatpush2.msra.mxu0 0.0
    %131 = vmatprep.subr.mxu0 0.0
    %132 = vmatpush2.msra.mxu0 0.0
    %133 = vmatprep.subr.mxu0 0.0
    %134 = vmatpush2.msra.mxu0 0.0
    %135 = vmatprep.subr.mxu0 0.0
    %136 = vmatpush2.msra.mxu0 0.0
    %137 = vmatprep.subr.mxu0 0.0
    %138 = vmatpush2.msra.mxu0 0.0
    %139 = vmatprep.subr.mxu0 0.0
    %140 = vmatpush2.msra.mxu0 0.0
    %141 = vmatprep.subr.mxu0 0.0
    %142 = vmatpush2.msra.mxu0 0.0
    %143 = vmatprep.subr.mxu0 0.0
    %144 = vmatpush2.msra.mxu0 0.0
    %145 = vmatprep.subr.mxu0 0.0
    %146 = vmatpush2.msra.mxu0 0.0
    %147 = vmatprep.subr.mxu0 0.0
    %148 = vmatpush2.msra.mxu0 0.0
    %149 = vmatprep.subr.mxu0 0.0
    %150 = vmatpush2.msra.mxu0 0.0
    %151 = vmatprep.subr.mxu0 0.0
    %152 = vmatpush2.msra.mxu0 0.0
    %153 = vmatprep.subr.mxu0 0.0
    %154 = vmatpush2.msra.mxu0 0.0
    %155 = vmatprep.subr.mxu0 0.0
    %156 = vmatpush2.msra.mxu0 0.0
    %157 = vmatprep.subr.mxu0 0.0
    %158 = vmatpush2.msra.mxu0 0.0
    %159 = vmatprep.subr.mxu0 0.0
    %160 = vmatpush2.msra.mxu0 0.0
    %161 = vmatprep.mubr.f32.mxu0 0.0
    %162 = vmatmul.mubr.f32.gmra.mxu0 %v70
    %v163 = vpop.f32.mrf.mxu0
    %v164 = vadd.f32 %v95, %v163
    %v165 = vpop.f32.mrf.mxu0
    %166 = vmatprep.mubr.f32.mxu0 0.0
    %167 = vmatmul.mubr.f32.gmra.mxu0 %v71
    %v168 = vpop.f32.mrf.mxu0
    %v169 = vadd.f32 %v95, %v168
    %v170 = vpop.f32.mrf.mxu0
    %171 = vmatprep.mubr.f32.mxu0 0.0
    %172 = vmatmul.mubr.f32.gmra.mxu0 %v72
    %v173 = vpop.f32.mrf.mxu0
    %v174 = vadd.f32 %v95, %v173
    %v175 = vpop.f32.mrf.mxu0
    %176 = vmatprep.mubr.f32.mxu0 0.0
    %177 = vmatmul.mubr.f32.gmra.mxu0 %v73
    %v178 = vpop.f32.mrf.mxu0
    %v179 = vadd.f32 %v95, %v178
    %v180 = vpop.f32.mrf.mxu0
    %181 = vdwg.mxu0
    %v182 = vtanh.pop %v164
    %v183 = vtanh.pop %v169
    %v184 = vtanh.pop %v174
    %v185 = vtanh.pop %v179
    %v186 = vld [vmem:[#allocation2] sm:$0xff]
    %v187 = vld [vmem:[#allocation2 + $0x8] sm:$0xff]
    %v188 = vld [vmem:[#allocation2 + $0x10] sm:$0xff]
    %v189 = vld [vmem:[#allocation2 + $0x18] sm:$0xff]
    %v190 = vld [vmem:[#allocation8] sm:$0xff]
    %v191 = vld [vmem:[#allocation8 + $0x8] sm:$0xff]
    %v192 = vld [vmem:[#allocation8 + $0x10] sm:$0xff]
    %v193 = vld [vmem:[#allocation8 + $0x18] sm:$0xff]
    %v194 = vld [vmem:[#allocation8 + $0x20] sm:$0xff]
    %v195 = vld [vmem:[#allocation8 + $0x28] sm:$0xff]
    %v196 = vld [vmem:[#allocation8 + $0x30] sm:$0xff]
    %v197 = vld [vmem:[#allocation8 + $0x38] sm:$0xff]
    %v198 = vld [vmem:[#allocation8 + $0x40] sm:$0xff]
    %v199 = vld [vmem:[#allocation8 + $0x48] sm:$0xff]
    %v200 = vld [vmem:[#allocation8 + $0x50] sm:$0xff]
    %v201 = vld [vmem:[#allocation8 + $0x58] sm:$0xff]
    %v202 = vld [vmem:[#allocation8 + $0x60] sm:$0xff]
    %v203 = vld [vmem:[#allocation8 + $0x68] sm:$0xff]
    %v204 = vld [vmem:[#allocation8 + $0x70] sm:$0xff]
    %v205 = vld [vmem:[#allocation8 + $0x78] sm:$0xff]
    %206 = vmatprep.subr.mxu0 0.0
    %207 = vmatpush1.msra.mxu0 %v205
    %208 = vmatprep.subr.mxu0 0.0
    %209 = vmatpush1.msra.mxu0 %v204
    %210 = vmatprep.subr.mxu0 0.0
    %211 = vmatpush1.msra.mxu0 %v203
    %212 = vmatprep.subr.mxu0 0.0
    %213 = vmatpush1.msra.mxu0 %v202
    %214 = vmatprep.subr.mxu0 0.0
    %215 = vmatpush1.msra.mxu0 %v201
    %216 = vmatprep.subr.mxu0 0.0
    %217 = vmatpush1.msra.mxu0 %v200
    %218 = vmatprep.subr.mxu0 0.0
    %219 = vmatpush1.msra.mxu0 %v199
    %220 = vmatprep.subr.mxu0 0.0
    %221 = vmatpush1.msra.mxu0 %v198
    %222 = vmatprep.subr.mxu0 0.0
    %223 = vmatpush1.msra.mxu0 %v197
    %224 = vmatprep.subr.mxu0 0.0
    %225 = vmatpush1.msra.mxu0 %v196
    %226 = vmatprep.subr.mxu0 0.0
    %227 = vmatpush1.msra.mxu0 %v195
    %228 = vmatprep.subr.mxu0 0.0
    %229 = vmatpush1.msra.mxu0 %v194
    %230 = vmatprep.subr.mxu0 0.0
    %231 = vmatpush1.msra.mxu0 %v193
    %232 = vmatprep.subr.mxu0 0.0
    %233 = vmatpush1.msra.mxu0 %v192
    %234 = vmatprep.subr.mxu0 0.0
    %235 = vmatpush1.msra.mxu0 %v191
    %236 = vmatprep.subr.mxu0 0.0
    %237 = vmatpush1.msra.mxu0 %v190
    %238 = vmatprep.subr.mxu0 0.0
    %239 = vmatpush2.msra.mxu0 0.0
    %240 = vmatprep.subr.mxu0 0.0
    %241 = vmatpush2.msra.mxu0 0.0
    %242 = vmatprep.subr.mxu0 0.0
    %243 = vmatpush2.msra.mxu0 0.0
    %244 = vmatprep.subr.mxu0 0.0
    %245 = vmatpush2.msra.mxu0 0.0
    %246 = vmatprep.subr.mxu0 0.0
    %247 = vmatpush2.msra.mxu0 0.0
    %248 = vmatprep.subr.mxu0 0.0
    %249 = vmatpush2.msra.mxu0 0.0
    %250 = vmatprep.subr.mxu0 0.0
    %251 = vmatpush2.msra.mxu0 0.0
    %252 = vmatprep.subr.mxu0 0.0
    %253 = vmatpush2.msra.mxu0 0.0
    %254 = vmatprep.subr.mxu0 0.0
    %255 = vmatpush2.msra.mxu0 0.0
    %256 = vmatprep.subr.mxu0 0.0
    %257 = vmatpush2.msra.mxu0 0.0
    %258 = vmatprep.subr.mxu0 0.0
    %259 = vmatpush2.msra.mxu0 0.0
    %260 = vmatprep.subr.mxu0 0.0
    %261 = vmatpush2.msra.mxu0 0.0
    %262 = vmatprep.subr.mxu0 0.0
    %263 = vmatpush2.msra.mxu0 0.0
    %264 = vmatprep.subr.mxu0 0.0
    %265 = vmatpush2.msra.mxu0 0.0
    %266 = vmatprep.subr.mxu0 0.0
    %267 = vmatpush2.msra.mxu0 0.0
    %268 = vmatprep.subr.mxu0 0.0
    %269 = vmatpush2.msra.mxu0 0.0
    %270 = vmatprep.mubr.f32.mxu0 0.0
    %271 = vmatmul.mubr.f32.gmra.mxu0 %v182
    %v272 = vpop.f32.mrf.mxu0
    %v273 = vadd.f32 0.0, %v272
    %v274 = vpop.f32.mrf.mxu0
    %275 = vmatprep.mubr.f32.mxu0 0.0
    %276 = vmatmul.mubr.f32.gmra.mxu0 %v183
    %v277 = vpop.f32.mrf.mxu0
    %v278 = vadd.f32 0.0, %v277
    %v279 = vpop.f32.mrf.mxu0
    %280 = vmatprep.mubr.f32.mxu0 0.0
    %281 = vmatmul.mubr.f32.gmra.mxu0 %v184
    %v282 = vpop.f32.mrf.mxu0
    %v283 = vadd.f32 0.0, %v282
    %v284 = vpop.f32.mrf.mxu0
    %285 = vmatprep.mubr.f32.mxu0 0.0
    %286 = vmatmul.mubr.f32.gmra.mxu0 %v185
    %v287 = vpop.f32.mrf.mxu0
    %v288 = vadd.f32 0.0, %v287
    %v289 = vpop.f32.mrf.mxu0
    %290 = vdwg.mxu0
    %v291 = vadd.f32 %v186, %v273
    %v292 = vadd.f32 %v187, %v278
    %v293 = vadd.f32 %v188, %v283
    %v294 = vadd.f32 %v189, %v288
    %295 = vst [vmem:[#allocation2] sm:$0xff] %v291
    %296 = vst [vmem:[#allocation2 + $0x8] sm:$0xff] %v292
    %297 = vst [vmem:[#allocation2 + $0x10] sm:$0xff] %v293
    %298 = vst [vmem:[#allocation2 + $0x18] sm:$0xff] %v294
    // Predicated region
    $region38: #{tpu_custom_call.1} parent=1 // pred_check
      %p299 = pneg %p62
    $region39: #{tpu_custom_call.1} parent=1 // pred_check_branch
      %301 = sbr.rel (%p299) target = $region41
    $region40: #{tpu_custom_call.1} parent=1 // pred_region
      %v302 = vld [vmem:[#allocation2] sm:$0xff]
      %v303 = vld [vmem:[#allocation2 + $0x8] sm:$0xff]
      %v304 = vld [vmem:[#allocation2 + $0x10] sm:$0xff]
      %v305 = vld [vmem:[#allocation2 + $0x18] sm:$0xff]
      %v306 = vld [vmem:[%s4] sm:$0x1]
      %v308 = vlaneseq
      %v309 = vshrl.u32 %v308, 7
      %v310 = vsub.s32 0, %v309
      %v311 = vrot.slane %v306, %v310
      %v313 = vadd.f32 %v302, %v311
      %v314 = vadd.f32 %v303, %v311
      %v315 = vadd.f32 %v304, %v311
      %v316 = vadd.f32 %v305, %v311
      %v317 = vmul.f32 %v313, 0.5
      %v318 = vmul.f32 %v314, 0.5
      %v319 = vmul.f32 %v315, 0.5
      %v320 = vmul.f32 %v316, 0.5
      %v321 = vtanh.pop %v317
      %v322 = vtanh.pop %v318
      %v323 = vtanh.pop %v319
      %v324 = vtanh.pop %v320
      %v325 = vadd.f32 %v321, 1.0
      %v326 = vadd.f32 %v322, 1.0
      %v327 = vadd.f32 %v323, 1.0
      %v328 = vadd.f32 %v324, 1.0
      %v329 = vmul.f32 %v325, 0.5
      %v330 = vmul.f32 %v326, 0.5
      %v331 = vmul.f32 %v327, 0.5
      %v332 = vmul.f32 %v328, 0.5
      %v333 = vmax.f32 %v329, 0.0001
      %v334 = vmax.f32 %v330, 0.0001
      %v335 = vmax.f32 %v331, 0.0001
      %v336 = vmax.f32 %v332, 0.0001
      %v337 = vmin.f32 %v333, 0.9999
      %v338 = vmin.f32 %v334, 0.9999
      %v339 = vmin.f32 %v335, 0.9999
      %v340 = vmin.f32 %v336, 0.9999
      %341 = vst [vmem:[#allocation9] sm:$0xff] %v337
      %342 = vst [vmem:[#allocation9 + $0x8] sm:$0xff] %v338
      %343 = vst [vmem:[#allocation9 + $0x10] sm:$0xff] %v339
      %344 = vst [vmem:[#allocation9 + $0x18] sm:$0xff] %v340
    $region41: #{tpu_custom_call.1} parent=1 // pred_fallthru
      _
    // Predicated region
    $region42: #{tpu_custom_call.1} parent=1 // pred_check
      _
    $region43: #{tpu_custom_call.1} parent=1 // pred_check_branch
      %346 = sbr.rel (0) target = $region45
    $region44: #{tpu_custom_call.1} parent=1 // pred_region
      %s348 = ssub.s32 512, 512
      %349 = vsyncadd [#allocation5], %s348
      %s350 = sshll.u32 [#allocation9], 4
      %s351 = int_to_ptr.vmem [resolvable:$true] %s350
      %356 = dma.vmem_to_hbm [thread:$0]  %s351, 512, %s5, [#allocation5], 128, 128, 8
    $region45: #{tpu_custom_call.1} parent=1 // pred_fallthru
      _
    // Predicated region
    $region46: #{tpu_custom_call.1} parent=1 // pred_check
      _
    $region47: #{tpu_custom_call.1} parent=1 // pred_check_branch
      %358 = sbr.rel (0) target = $region49
    $region48: #{tpu_custom_call.1} parent=1 // pred_region
      %359 = dma.done [#allocation5], 512
    $region49: #{tpu_custom_call.1} parent=1 // pred_fallthru
      _
    %360 = vsyncpa [#allocation4], 1
    %361 = vsyncpa [#allocation7], 1
    %362 = vsyncpa [#allocation5], 1

</llo_original>
